<compile_context>
chip_gen: v7x
topology: tpu7x:2x2x1
jax: 0.10.0
libtpu: 0.0.40
codegen_flags: <defaults>
</compile_context>

<pallas_src>
import jax
import jax.numpy as jnp
from jax.experimental import pallas as pl
from jax.experimental.pallas import tpu as pltpu


def _skip_add_kernel(x_ref, skip_ref, o_ref):
    # Pure elementwise residual/skip add on the current VMEM tile (VPU work).
    o_ref[...] = x_ref[...] + skip_ref[...]


# Lane-dense widths to try (all multiples of the 128-lane vreg width).
_LANE_CANDIDATES = (2048, 1024, 512, 256, 128)

# Per-input bytes below which we skip the Pallas launch entirely: dispatch
# overhead + lost XLA fusion dominates tiny residual adds.
_SMALL_TENSOR_BYTES = 1 << 20  # 1 MiB


def _choose_lane_dense_layout(size):
    """Largest lane-dense (rows, cols) flattening with cols a multiple of 128.

    Returns None when no 128-aligned width divides the element count; callers
    should fall back to plain XLA in that case (masked narrow-lane stores are
    the single biggest perf loser for this op).
    """
    for min_rows in (8, 1):
        for cols in _LANE_CANDIDATES:
            if size % cols == 0 and size // cols >= min_rows:
                return size // cols, cols
    return None


def _sublane_multiple(dtype):
    # Sub-32-bit dtypes pack along sublanes: one vreg holds 16 bf16 rows /
    # 32 int8 rows, so round block rows to the packing granularity.
    itemsize = jnp.dtype(dtype).itemsize
    return {4: 8, 2: 16, 1: 32}.get(itemsize, 8)


def _target_block_bytes():
    # ~2 MiB/input is already >=85% of the HBM roofline on all generations.
    # On chips with >=100 MiB VMEM (v5e/v6e) a 4 MiB block buys ~1% more and
    # is free; keep 2 MiB on v7x (64 MiB VMEM per TC).
    try:
        if pltpu.get_tpu_info().vmem_capacity_bytes >= (100 << 20):
            return 4 << 20
    except Exception:
        pass
    return 2 << 20


def skip_connection(x: jnp.ndarray, skip: jnp.ndarray, *,
                    force_pallas: bool = False) -> jnp.ndarray:
    """Pallas implementation of SkipConnection.forward: returns x + skip."""
    assert x.shape == skip.shape, "x and skip must have identical shapes"
    assert x.dtype == skip.dtype, "x and skip must have identical dtypes"

    orig_shape = x.shape
    size = int(x.size)
    itemsize = jnp.dtype(x.dtype).itemsize
    nbytes = size * itemsize

    # Degenerate / tiny tensors: let XLA fuse the add (free) instead of a
    # standalone kernel launch.
    if size == 0 or (nbytes < _SMALL_TENSOR_BYTES and not force_pallas):
        return x + skip

    layout = _choose_lane_dense_layout(size)
    if layout is None:
        # No 128-aligned lane-dense flattening exists (odd element count):
        # XLA's fused elementwise add runs at roofline; a Pallas kernel with a
        # narrow lane dim would not.
        return x + skip

    rows, cols = layout
    x2 = x.reshape(rows, cols)      # contiguous row-major: layout bitcast
    s2 = skip.reshape(rows, cols)

    # --- block-row selection -------------------------------------------------
    sublane = _sublane_multiple(x.dtype)
    row_bytes = cols * itemsize
    target = _target_block_bytes()

    if rows <= sublane:
        # Tiny tensor: a single full-dim block (allowed by the (8,128) rule).
        block_rows = rows
    else:
        block_rows = max(sublane,
                         (target // row_bytes) // sublane * sublane)
        block_rows = min(block_rows, rows)

    grid_r = pl.cdiv(rows, block_rows)

    # --- VMEM budget: 3 streams x 2 pipeline buffers x block + headroom ------
    block_bytes = block_rows * cols * itemsize
    vmem_limit = min(int(3 * 2 * block_bytes * 1.25) + (2 << 20), 40 << 20)

    out2 = pl.pallas_call(
        _skip_add_kernel,
        out_shape=jax.ShapeDtypeStruct((rows, cols), x.dtype),
        grid_spec=pltpu.PrefetchScalarGridSpec(
            num_scalar_prefetch=0,
            grid=(grid_r,),
            in_specs=[
                pl.BlockSpec((block_rows, cols), lambda i: (i, 0)),
                pl.BlockSpec((block_rows, cols), lambda i: (i, 0)),
            ],
            out_specs=pl.BlockSpec((block_rows, cols), lambda i: (i, 0)),
        ),
        compiler_params=pltpu.CompilerParams(
            dimension_semantics=("parallel",),
            vmem_limit_bytes=vmem_limit,
        ),
    )(x2, s2)

    return out2.reshape(orig_shape)


if __name__ == "__main__":
    key = jax.random.PRNGKey(0)
    kx, ks = jax.random.split(key)

    # Small NCHW shape consistent with the module's usage. force_pallas=True
    # so the Pallas kernel itself is exercised (the production default would
    # bypass to a fused XLA add for a tensor this small).
    x = jax.random.normal(kx, (2, 4, 16, 16), dtype=jnp.float32)
    skip = jax.random.normal(ks, (2, 4, 16, 16), dtype=jnp.float32)
    out = jax.block_until_ready(skip_connection(x, skip, force_pallas=True))
    ref = x + skip
    assert out.shape == ref.shape and out.dtype == ref.dtype
    assert jnp.allclose(out, ref, atol=1e-6, rtol=1e-6)

    # Default path on a 1 MiB-per-input tensor: goes through the Pallas kernel
    # with a single lane-dense block (no forced 2-block split).
    kx1, ks1 = jax.random.split(ks)
    x_med = jax.random.normal(kx1, (1, 8, 128, 256), dtype=jnp.float32)
    s_med = jax.random.normal(ks1, (1, 8, 128, 256), dtype=jnp.float32)
    out_med = jax.block_until_ready(skip_connection(x_med, s_med))
    assert jnp.allclose(out_med, x_med + s_med, atol=1e-6, rtol=1e-6)

    # Small-tensor bypass (default) and odd, non-128-divisible fallback paths.
    out_small = jax.block_until_ready(skip_connection(x, skip))
    assert jnp.allclose(out_small, ref, atol=1e-6, rtol=1e-6)

    kx2, ks2 = jax.random.split(ks1)
    x_odd = jax.random.normal(kx2, (2, 3, 5, 7), dtype=jnp.float32)
    s_odd = jax.random.normal(ks2, (2, 3, 5, 7), dtype=jnp.float32)
    out_odd = jax.block_until_ready(skip_connection(x_odd, s_odd))
    assert jnp.allclose(out_odd, x_odd + s_odd, atol=1e-6, rtol=1e-6)

    print("KERNEL_OK")
</pallas_src>

<mosaic_0001>
module attributes {stable_mosaic.version = 11 : i64} {
  func.func @_skip_add_kernel(%arg0: i32, %arg1: memref<8x256xf32, #tpu.memory_space<vmem>>, %arg2: memref<8x256xf32, #tpu.memory_space<vmem>>, %arg3: memref<8x256xf32, #tpu.memory_space<vmem>>) attributes {dimension_semantics = [#tpu.dimension_semantics<parallel>], iteration_bounds = array<i64: 1>, scalar_prefetch = 0 : i64, scratch_operands = 0 : i64, tpu.core_type = #tpu.core_type<tc>, window_params = [{transform_indices = @transform_0, window_bounds = array<i64: 8, 256>}, {transform_indices = @transform_1, window_bounds = array<i64: 8, 256>}, {transform_indices = @transform_2, window_bounds = array<i64: 8, 256>}]} {
    %c0 = arith.constant 0 : index
    %c0_0 = arith.constant 0 : index
    %0 = vector.load %arg1[%c0, %c0_0] : memref<8x256xf32, #tpu.memory_space<vmem>>, vector<8x256xf32>
    %c0_1 = arith.constant 0 : index
    %c0_2 = arith.constant 0 : index
    %1 = vector.load %arg2[%c0_1, %c0_2] : memref<8x256xf32, #tpu.memory_space<vmem>>, vector<8x256xf32>
    %2 = arith.addf %0, %1 : vector<8x256xf32>
    %c0_3 = arith.constant 0 : index
    %c0_4 = arith.constant 0 : index
    %3 = vector.load %arg3[%c0_3, %c0_4] : memref<8x256xf32, #tpu.memory_space<vmem>>, vector<8x256xf32>
    tpu.vector_store %arg3[%c0_3, %c0_4], %2 {strides = array<i32>} : memref<8x256xf32, #tpu.memory_space<vmem>>, vector<8x256xf32>,
    return
  }
  func.func @transform_0(%arg0: i32) -> (i32, i32) {
    %c0_i32 = arith.constant 0 : i32
    %c0_i32_0 = arith.constant 0 : i32
    return %arg0, %c0_i32 : i32, i32
  }
  func.func @transform_1(%arg0: i32) -> (i32, i32) {
    %c0_i32 = arith.constant 0 : i32
    %c0_i32_0 = arith.constant 0 : i32
    return %arg0, %c0_i32 : i32, i32
  }
  func.func @transform_2(%arg0: i32) -> (i32, i32) {
    %c0_i32 = arith.constant 0 : i32
    %c0_i32_0 = arith.constant 0 : i32
    return %arg0, %c0_i32 : i32, i32
  }
}

</mosaic_0001>

<llo_original>
// kernel: tpu_custom_call.1
$region0: #{tpu_custom_call.1}
  #allocation0 [shape = 'u32[]', space=smem, size = 0x4, offset = 0x4, fixed_abs, tag = 'smem constant byte address 0x4 - core index']
  #allocation1 [shape = 'u32[144,128]{1,0:T(1,128)}', space=vmem, size = 0x12000, scoped, tag = 'internal scratch']
  %s0 = inlined_call_operand.hbm [shape: f32[8,256], index: 0, kind: input, shape index: {}]
  %s1 = inlined_call_operand.hbm [shape: f32[8,256], index: 1, kind: input, shape index: {}]
  %s2 = inlined_call_operand.hbm [shape: f32[8,256], index: 2, kind: output, shape index: {}]
  %s3 = sld [smem:[#allocation0]]
  $region26: #{tpu_custom_call.1} parent=0
    _
  %s5 = ssub.s32 1, %s3
  %s6 = scalar_select 0, %s5, %s3
  $region1: #{tpu_custom_call.1} parent=0
    #allocation2 [shape = 'u8[8192]{0}', space=vmem, size = 0x2000, scoped, tag = 'input window, operand 0, single buffered']
    #allocation3 [shape = 's32[1]{0}', space=sflag, size = 0x4, scoped, tag = 'scoped memory for tpu_custom_call.1']
    #allocation4 [shape = 's32[1]{0}', space=sflag, size = 0x4, scoped, tag = 'scoped memory for tpu_custom_call.1']
    #allocation5 [shape = 'u8[8192]{0}', space=vmem, size = 0x2000, scoped, tag = 'input window, operand 1, single buffered']
    #allocation6 [shape = 's32[1]{0}', space=sflag, size = 0x4, scoped, tag = 'scoped memory for tpu_custom_call.1']
    #allocation7 [shape = 'u8[8192]{0}', space=vmem, size = 0x2000, scoped, tag = 'output window, operand 0, single buffered']
    %7 = vsyncpa [#allocation3], 0
    %8 = vsyncpa [#allocation6], 0
    %9 = vsyncpa [#allocation4], 0
    // Predicated region
    $region2: #{tpu_custom_call.1} parent=1 // pred_check
      _
    $region3: #{tpu_custom_call.1} parent=1 // pred_check_branch
      %11 = sbr.rel (0) target = $region5
    $region4: #{tpu_custom_call.1} parent=1 // pred_region
      %s13 = ssub.s32 256, 256
      %14 = vsyncadd [#allocation3], %s13
      %s16 = sshll.u32 [#allocation2], 4
      %s17 = int_to_ptr.vmem [resolvable:$true] %s16
      %19 = dma.hbm_to_vmem [thread:$0]  %s0, 256, %s17, [#allocation3]
    $region5: #{tpu_custom_call.1} parent=1 // pred_fallthru
      _
    // Predicated region
    $region6: #{tpu_custom_call.1} parent=1 // pred_check
      _
    $region7: #{tpu_custom_call.1} parent=1 // pred_check_branch
      %21 = sbr.rel (0) target = $region9
    $region8: #{tpu_custom_call.1} parent=1 // pred_region
      %s23 = ssub.s32 256, 256
      %24 = vsyncadd [#allocation6], %s23
      %s26 = sshll.u32 [#allocation5], 4
      %s27 = int_to_ptr.vmem [resolvable:$true] %s26
      %29 = dma.hbm_to_vmem [thread:$0]  %s1, 256, %s27, [#allocation6]
    $region9: #{tpu_custom_call.1} parent=1 // pred_fallthru
      _
    // Predicated region
    $region10: #{tpu_custom_call.1} parent=1 // pred_check
      _
    $region11: #{tpu_custom_call.1} parent=1 // pred_check_branch
      %31 = sbr.rel (0) target = $region13
    $region12: #{tpu_custom_call.1} parent=1 // pred_region
      %32 = dma.done [#allocation3], 256
    $region13: #{tpu_custom_call.1} parent=1 // pred_fallthru
      _
    // Predicated region
    $region14: #{tpu_custom_call.1} parent=1 // pred_check
      _
    $region15: #{tpu_custom_call.1} parent=1 // pred_check_branch
      %34 = sbr.rel (0) target = $region17
    $region16: #{tpu_custom_call.1} parent=1 // pred_region
      %35 = dma.done [#allocation6], 256
    $region17: #{tpu_custom_call.1} parent=1 // pred_fallthru
      _
    %v36 = vld [vmem:[#allocation2] sm:$0xff]
    %v37 = vld [vmem:[#allocation2 + $0x8] sm:$0xff]
    %v38 = vld [vmem:[#allocation5] sm:$0xff]
    %v39 = vld [vmem:[#allocation5 + $0x8] sm:$0xff]
    %v40 = vadd.f32 %v36, %v38
    %v41 = vadd.f32 %v37, %v39
    %42 = vst [vmem:[#allocation7] sm:$0xff] %v40
    %43 = vst [vmem:[#allocation7 + $0x8] sm:$0xff] %v41
    // Predicated region
    $region18: #{tpu_custom_call.1} parent=1 // pred_check
      _
    $region19: #{tpu_custom_call.1} parent=1 // pred_check_branch
      %45 = sbr.rel (0) target = $region21
    $region20: #{tpu_custom_call.1} parent=1 // pred_region
      %s47 = ssub.s32 256, 256
      %48 = vsyncadd [#allocation4], %s47
      %s50 = sshll.u32 [#allocation7], 4
      %s51 = int_to_ptr.vmem [resolvable:$true] %s50
      %53 = dma.vmem_to_hbm [thread:$0]  %s51, 256, %s2, [#allocation4]
    $region21: #{tpu_custom_call.1} parent=1 // pred_fallthru
      _
    // Predicated region
    $region22: #{tpu_custom_call.1} parent=1 // pred_check
      _
    $region23: #{tpu_custom_call.1} parent=1 // pred_check_branch
      %55 = sbr.rel (0) target = $region25
    $region24: #{tpu_custom_call.1} parent=1 // pred_region
      %56 = dma.done [#allocation4], 256
    $region25: #{tpu_custom_call.1} parent=1 // pred_fallthru
      _
    %57 = vsyncpa [#allocation3], 1
    %58 = vsyncpa [#allocation6], 1
    %59 = vsyncpa [#allocation4], 1

</llo_original>
